<compile_context>
chip_gen: v7x
topology: tpu7x:2x2x1
jax: 0.10.0
libtpu: 0.0.40
codegen_flags: <defaults>
</compile_context>

<pallas_src>
import functools
import math

import jax
import jax.numpy as jnp
from jax import lax
from jax.experimental import pallas as pl
from jax.experimental.pallas import tpu as pltpu


def _scale_norm_kernel(x_ref, o_ref, *, scale, eps):
    # x_ref / o_ref: (NB, C, tile_hw) block; reduce over the channel axis (1).
    x = x_ref[...]
    xf = x.astype(jnp.float32)
    sq = jnp.sum(xf * xf, axis=1, keepdims=True)            # (NB, 1, tile_hw)
    # max(sqrt(s), eps) == sqrt(max(s, eps^2)) for s >= 0 -> clamped rsqrt (EUP)
    inv = lax.rsqrt(jnp.maximum(sq, eps * eps))
    factor = (scale * inv).astype(x.dtype)                   # small row only
    o_ref[...] = x * factor


def _pick_tiles(N, C, HW, itemsize, target_block_bytes):
    """Pick (batch_block, spatial_tile, spatial_blocks) for the grid."""
    lane_hw = pl.cdiv(HW, 128) * 128          # spatial extent rounded to lanes
    bytes_per_col = C * itemsize

    # ~1 KiB minimum contiguous row length for the strided C-row DMA
    # (256 lanes for f32, 512 for bf16), never below one vreg width.
    min_tile = max(128, pl.cdiv(1024, 128 * itemsize) * 128)

    tile_hw = (target_block_bytes // max(bytes_per_col, 1)) // 128 * 128
    tile_hw = max(128, min_tile, tile_hw)
    tile_hw = min(tile_hw, lane_hw)

    if tile_hw >= lane_hw:
        # Whole spatial extent in one block: use the exact array dim (allowed
        # by the block_shape rule "equal to the full array dim").
        tile_hw = HW
        sp_blocks = 1
    else:
        sp_blocks = pl.cdiv(HW, tile_hw)      # edge block clamped/masked

    # Batch-block only when the spatial axis is already exhausted.
    nb = 1
    if sp_blocks == 1:
        block_bytes = C * lane_hw * itemsize
        nb = max(1, min(N, target_block_bytes // max(block_bytes, 1)))
        # Keep at least 2 grid steps for megacore (v7x) when possible.
        if nb >= N and N >= 2:
            nb = pl.cdiv(N, 2)

    # Single-batch, single-spatial-block case: split spatially if we can, so
    # both v7x TensorCores get work.
    if N == 1 and nb == 1 and sp_blocks == 1 and lane_hw >= 256:
        tile_hw = pl.cdiv(lane_hw // 128, 2) * 128
        sp_blocks = pl.cdiv(HW, tile_hw)

    return nb, tile_hw, sp_blocks


def scale_norm_nchw(x, *, scale, eps=1e-5, target_block_bytes=4 << 20):
    """ScaleNorm over dim=1 of an NCHW tensor, matching the PyTorch module."""
    N, C, H, W = x.shape
    HW = H * W
    # Contiguous reshape: no data movement, just a different view of NCHW.
    x3 = x.reshape(N, C, HW)

    itemsize = jnp.dtype(x.dtype).itemsize
    nb, tile_hw, sp_blocks = _pick_tiles(N, C, HW, itemsize, target_block_bytes)
    grid = (pl.cdiv(N, nb), sp_blocks)

    # VMEM budget: ~2 input + 2 output pipelined buffers of one block each.
    block_bytes = nb * C * (pl.cdiv(tile_hw, 128) * 128) * itemsize
    vmem_limit = int(min(max(32 << 20, 5 * block_bytes), 48 << 20))

    kernel = functools.partial(_scale_norm_kernel,
                               scale=float(scale), eps=float(eps))

    y3 = pl.pallas_call(
        kernel,
        out_shape=jax.ShapeDtypeStruct((N, C, HW), x.dtype),
        grid_spec=pltpu.PrefetchScalarGridSpec(
            num_scalar_prefetch=0,
            grid=grid,
            in_specs=[pl.BlockSpec((nb, C, tile_hw), lambda b, s: (b, 0, s))],
            out_specs=pl.BlockSpec((nb, C, tile_hw), lambda b, s: (b, 0, s)),
        ),
        compiler_params=pltpu.CompilerParams(
            dimension_semantics=("parallel", "parallel"),
            vmem_limit_bytes=vmem_limit),
    )(x3)

    return y3.reshape(N, C, H, W)


if __name__ == "__main__":
    key = jax.random.PRNGKey(0)
    N, C, H, W = 2, 4, 16, 16
    x = jax.random.normal(key, (N, C, H, W), dtype=jnp.float32)

    # ScaleNorm(scale) — deterministic scalar "parameter", conventionally sqrt(dim).
    scale = math.sqrt(C)
    eps = 1e-5

    y = jax.jit(lambda a: scale_norm_nchw(a, scale=scale, eps=eps))(x)
    y = jax.block_until_ready(y)

    # Reference in plain JAX (same math as the PyTorch module).
    norm = jnp.sqrt(jnp.sum(x * x, axis=1, keepdims=True))
    y_ref = x * (scale / jnp.maximum(norm, eps))

    assert y.shape == x.shape and y.dtype == x.dtype
    assert jnp.allclose(y, y_ref, atol=1e-5, rtol=1e-5)
    print("KERNEL_OK")
</pallas_src>

<mosaic_0001>
module attributes {stable_mosaic.version = 11 : i64} {
  func.func @_scale_norm_kernel(%arg0: i32, %arg1: i32, %arg2: memref<1x4x256xf32, #tpu.memory_space<vmem>>, %arg3: memref<1x4x256xf32, #tpu.memory_space<vmem>>) attributes {dimension_semantics = [#tpu.dimension_semantics<parallel>, #tpu.dimension_semantics<parallel>], iteration_bounds = array<i64: 2, 1>, scalar_prefetch = 0 : i64, scratch_operands = 0 : i64, tpu.core_type = #tpu.core_type<tc>, window_params = [{transform_indices = @transform_0, window_bounds = array<i64: 1, 4, 256>}, {transform_indices = @transform_1, window_bounds = array<i64: 1, 4, 256>}]} {
    %c0 = arith.constant 0 : index
    %c0_0 = arith.constant 0 : index
    %c0_1 = arith.constant 0 : index
    %0 = vector.load %arg2[%c0, %c0_0, %c0_1] : memref<1x4x256xf32, #tpu.memory_space<vmem>>, vector<1x4x256xf32>
    %1 = arith.mulf %0, %0 : vector<1x4x256xf32>
    %cst = arith.constant dense<0.000000e+00> : vector<1x256xf32>
    %2 = vector.multi_reduction <add>, %1, %cst [1] : vector<1x4x256xf32> to vector<1x256xf32>
    %3 = vector.shape_cast %2 : vector<1x256xf32> to vector<1x1x256xf32>
    %cst_2 = arith.constant 1.000000e-10 : f32
    %4 = vector.broadcast %cst_2 : f32 to vector<1x1x256xf32>
    %5 = arith.maximumf %3, %4 : vector<1x1x256xf32>
    %6 = math.rsqrt %5 : vector<1x1x256xf32>
    %cst_3 = arith.constant 2.000000e+00 : f32
    %7 = vector.broadcast %cst_3 : f32 to vector<1x1x256xf32>
    %8 = arith.mulf %7, %6 : vector<1x1x256xf32>
    %9 = vector.broadcast %8 : vector<1x1x256xf32> to vector<1x4x256xf32>
    %10 = arith.mulf %0, %9 : vector<1x4x256xf32>
    %c0_4 = arith.constant 0 : index
    %c0_5 = arith.constant 0 : index
    %c0_6 = arith.constant 0 : index
    %11 = vector.load %arg3[%c0_4, %c0_5, %c0_6] : memref<1x4x256xf32, #tpu.memory_space<vmem>>, vector<1x4x256xf32>
    tpu.vector_store %arg3[%c0_4, %c0_5, %c0_6], %10 {strides = array<i32>} : memref<1x4x256xf32, #tpu.memory_space<vmem>>, vector<1x4x256xf32>,
    return
  }
  func.func @transform_0(%arg0: i32, %arg1: i32) -> (i32, i32, i32) {
    %c0_i32 = arith.constant 0 : i32
    %c0_i32_0 = arith.constant 0 : i32
    return %arg0, %c0_i32, %arg1 : i32, i32, i32
  }
  func.func @transform_1(%arg0: i32, %arg1: i32) -> (i32, i32, i32) {
    %c0_i32 = arith.constant 0 : i32
    %c0_i32_0 = arith.constant 0 : i32
    return %arg0, %c0_i32, %arg1 : i32, i32, i32
  }
}

</mosaic_0001>

<llo_original>
// kernel: _lambda_.1
$region0: #{_lambda_.1}
  #allocation0 [shape = 'u32[]', space=smem, size = 0x4, offset = 0x4, fixed_abs, tag = 'smem constant byte address 0x4 - core index']
  #allocation1 [shape = 'u32[144,128]{1,0:T(1,128)}', space=vmem, size = 0x12000, scoped, tag = 'internal scratch']
  %s0 = inlined_call_operand.vmem [shape: f32[2,4,256], index: 0, kind: input, shape index: {}]
  %s1 = inlined_call_operand.vmem [shape: f32[2,4,256], index: 1, kind: output, shape index: {}]
  %s2 = sld [smem:[#allocation0]]
  $region37: #{_lambda_.1} parent=0
    _
  %s4 = ssub.s32 1, %s2
  %s5 = scalar_select 0, %s4, %s2
  loop: start=0, step=1, limit=4
  $region2: #{_lambda_.1} parent=0 // loop_pre_header
    _
  $region3: #{_lambda_.1} parent=0 // loop_header
    %s7 = sphi 0, %s11
    %p8 = scmp.ge.s32.totalorder %s7, 4
    %s14 = sphi 0, %s26
    %s15 = sphi 0, %s22
    %s16 = sphi 0, %s14
    %s17 = sphi 0, %s15
    %s18 = sphi 0, %s16
    %s19 = sphi 0, %s17
    %s31 = sphi 0, %s33
    %s34 = sphi 0, %s31
    %s35 = sphi 0, %s34
    %s51 = sphi 0, %s35
    %s59 = sphi 0, %s61
    %s62 = sphi 0, %s59
    %s63 = sphi 0, %s62
    %s79 = sphi 0, %s63
  $region4: #{_lambda_.1} parent=0 // loop_header_branch
    %10 = sbr.rel (%p8) target = $region8
  $region5: #{_lambda_.1} parent=0 // loop_body
    %s12 = ssub.s32 %s7, 1
    %s13 = ssub.s32 %s7, 2
    %s20 = sadd.s32 1, %s15
    %p21 = scmp.ge.s32.totalorder %s20, 1
    %s22 = scalar_select %p21, 0, %s20
    %s23 = sadd.s32 1, %s14
    %s24 = scalar_select %p21, %s23, %s14
    %p25 = scmp.ge.s32.totalorder %s24, 2
    %s26 = scalar_select %p25, 0, %s24
    %s27 = ssub.s32 %s14, %s26
    %s28 = ssub.s32 %s15, %s22
    %s29 = sor.u32 %s27, %s28
    %p30 = scmp.eq.s32.totalorder %s29, 0
    %s32 = sadd.s32 %s31, 1
    %s33 = scalar_select %p30, %s31, %s32
    %p36 = pneg %p30
    %p37 = scmp.eq.s32.totalorder %s7, 1
    %p38 = por %p36, %p37
    %p39 = scmp.ne.s32.totalorder %s31, %s34
    %p40 = scmp.eq.s32.totalorder %s7, 0
    %p41 = por %p39, %p40
    %p42 = scmp.ne.s32.totalorder %s31, %s34
    %p43 = scmp.eq.s32.totalorder %s12, 1
    %p44 = por %p42, %p43
    %p45 = scmp.ne.s32.totalorder %s34, %s35
    %p46 = scmp.eq.s32.totalorder %s12, 0
    %p47 = por %p45, %p46
    %p48 = scmp.ne.s32.totalorder %s34, %s35
    %p49 = scmp.eq.s32.totalorder %s13, 1
    %p50 = por %p48, %p49
    %p52 = scmp.ne.s32.totalorder %s35, %s51
    %p53 = scmp.eq.s32.totalorder %s13, 0
    %p54 = por %p52, %p53
    %s55 = ssub.s32 %s14, %s26
    %s56 = ssub.s32 %s15, %s22
    %s57 = sor.u32 %s55, %s56
    %p58 = scmp.eq.s32.totalorder %s57, 0
    %s60 = sadd.s32 %s59, 1
    %s61 = scalar_select %p58, %s59, %s60
    %p64 = pneg %p58
    %p65 = scmp.eq.s32.totalorder %s7, 1
    %p66 = por %p64, %p65
    %p67 = scmp.ne.s32.totalorder %s59, %s62
    %p68 = scmp.eq.s32.totalorder %s7, 0
    %p69 = por %p67, %p68
    %p70 = scmp.ne.s32.totalorder %s59, %s62
    %p71 = scmp.eq.s32.totalorder %s12, 1
    %p72 = por %p70, %p71
    %p73 = scmp.ne.s32.totalorder %s62, %s63
    %p74 = scmp.eq.s32.totalorder %s12, 0
    %p75 = por %p73, %p74
    %p76 = scmp.ne.s32.totalorder %s62, %s63
    %p77 = scmp.eq.s32.totalorder %s13, 1
    %p78 = por %p76, %p77
    %p80 = scmp.ne.s32.totalorder %s63, %s79
    %p81 = scmp.eq.s32.totalorder %s13, 0
    %p82 = por %p80, %p81
    %p83 = scmp.le.s32.totalorder 1, %s7
    %p84 = scmp.lt.s32.totalorder %s7, 3
    %p85 = pnand %p83, %p84
    %p86 = pneg %p85
    // Predicated region
    $region9: #{_lambda_.1} parent=5 // pred_check
      _
    $region10: #{_lambda_.1} parent=5 // pred_check_branch
      %88 = sbr.rel (%p85) target = $region12
    $region11: #{_lambda_.1} parent=5 // pred_region
      %s89 = ssub.s32 %s7, 1
    $region12: #{_lambda_.1} parent=5 // pred_fallthru
      _
    %p90 = scmp.lt.s32.totalorder %s7, 2
    // Predicated region
    $region13: #{_lambda_.1} parent=5 // pred_check
      %p91 = pneg %p90
    $region14: #{_lambda_.1} parent=5 // pred_check_branch
      %93 = sbr.rel (%p91) target = $region16
    $region15: #{_lambda_.1} parent=5 // pred_region
      // Predicated region
      $region17: #{_lambda_.1} parent=15 // pred_check
        %p94 = pneg %p41
      $region18: #{_lambda_.1} parent=15 // pred_check_branch
        %96 = sbr.rel (%p94) target = $region20
      $region19: #{_lambda_.1} parent=15 // pred_region
        %s97 = smul.u32 2, %s15
        %p98 = scmp.lt.s32.totalorder %s14, 1
        %s99 = scalar_select %p98, %s14, 1
        %p100 = scmp.lt.s32.totalorder %s97, 1
        %s101 = scalar_select %p100, %s97, 1
        %s102 = smul.addr %s99, 2
        %s103 = sadd.s32 %s101, %s102
        %s104 = smul.addr %s103, 4
        %s105 = scalar_lea.vmem %s0, %s104
        %s106 = smul.u32 2, %s15
      $region20: #{_lambda_.1} parent=15 // pred_fallthru
        _
    $region16: #{_lambda_.1} parent=5 // pred_fallthru
      _
    %p107 = scmp.le.s32.totalorder 1, %s7
    %p108 = scmp.lt.s32.totalorder %s7, 3
    %p109 = pnand %p107, %p108
    %p110 = pneg %p109
    // Predicated region
    $region21: #{_lambda_.1} parent=5 // pred_check
      _
    $region22: #{_lambda_.1} parent=5 // pred_check_branch
      %112 = sbr.rel (%p109) target = $region24
    $region23: #{_lambda_.1} parent=5 // pred_region
      %s113 = ssub.s32 %s7, 1
      %s114 = smul.u32 2, %s17
      %p115 = scmp.lt.s32.totalorder %s16, 1
      %s116 = scalar_select %p115, %s16, 1
      %p117 = scmp.lt.s32.totalorder %s114, 1
      %s118 = scalar_select %p117, %s114, 1
      %s119 = smul.addr %s116, 2
      %s120 = sadd.s32 %s118, %s119
      %s121 = smul.addr %s120, 4
      %s122 = scalar_lea.vmem %s0, %s121
      %p123 = pneg %p47
      %p124 = pneg %p44
      %p125 = pneg %p75
      %p126 = pneg %p72
      %s127 = smul.u32 2, %s17
      %p128 = scmp.lt.s32.totalorder %s16, 1
      %s129 = scalar_select %p128, %s16, 1
      %p130 = scmp.lt.s32.totalorder %s127, 1
      %s131 = scalar_select %p130, %s127, 1
      %s132 = smul.addr %s129, 2
      %s133 = sadd.s32 %s131, %s132
      %s134 = smul.addr %s133, 4
      %s135 = scalar_lea.vmem %s1, %s134
      %s136 = smul.u32 2, %s17
      %p137 = scmp.lt.s32.totalorder %s16, 1
      %s138 = scalar_select %p137, %s16, 1
      %p139 = scmp.lt.s32.totalorder %s136, 1
      %s140 = scalar_select %p139, %s136, 1
      %s141 = smul.addr %s138, 2
      %s142 = sadd.s32 %s140, %s141
      %s143 = smul.addr %s142, 4
      %s144 = scalar_lea.vmem %s0, %s143
      %s145 = smul.u32 2, %s17
      %s146 = smul.u32 2, %s17
      %p147 = scmp.lt.s32.totalorder %s16, 1
      %s148 = scalar_select %p147, %s16, 1
      %p149 = scmp.lt.s32.totalorder %s146, 1
      %s150 = scalar_select %p149, %s146, 1
      %s151 = smul.addr %s148, 2
      %s152 = sadd.s32 %s150, %s151
      %s153 = smul.addr %s152, 4
      %s154 = scalar_lea.vmem %s1, %s153
      %s155 = smul.u32 2, %s17
      %v156 = vld [vmem:[%s144] sm:$0xff]
      %v157 = vmul.f32 %v156, %v156
      %v159 = vcombine.high %v157, %v157
      %vm161 = vcmask 1043456
      %v162 = vsel %vm161, %v157, 0.0
      %v163 = vrot.slane %v162, 4
      %v164 = vadd.f32 %v162, %v163
      %v165 = vrot.slane %v164, 2
      %v166 = vadd.f32 %v164, %v165
      %v167 = vrot.slane %v166, 1
      %v168 = vadd.f32 %v166, %v167
      %v169 = vsel %vm161, %v159, 0.0
      %v170 = vrot.slane %v169, 4
      %v171 = vadd.f32 %v169, %v170
      %v172 = vrot.slane %v171, 2
      %v173 = vadd.f32 %v171, %v172
      %v174 = vrot.slane %v173, 1
      %v175 = vadd.f32 %v173, %v174
      %v176 = vmax.f32 %v168, 1e-10
      %v177 = vmax.f32 %v175, 1e-10
      %v178 = vrsqrt.pop %v176
      %v179 = vrsqrt.pop %v177
      %v180 = vmul.f32 %v178, 2.0
      %v181 = vmul.f32 %v179, 2.0
      %v184 = vcombine.low %v180, %v181
      %v186 = vmul.f32 %v156, %v184
      %187 = vst [vmem:[%s154] sm:$0xff] %v186
      %s188 = smul.u32 2, %s17
      %p189 = scmp.lt.s32.totalorder %s16, 1
      %s190 = scalar_select %p189, %s16, 1
      %p191 = scmp.lt.s32.totalorder %s188, 1
      %s192 = scalar_select %p191, %s188, 1
      %s193 = smul.addr %s190, 2
      %s194 = sadd.s32 %s192, %s193
      %s195 = smul.addr %s194, 4
      %s196 = scalar_lea.vmem %s1, %s195
      // Predicated region
      $region25: #{_lambda_.1} parent=23 // pred_check
        %p197 = pneg %p72
      $region26: #{_lambda_.1} parent=23 // pred_check_branch
        %199 = sbr.rel (%p197) target = $region28
      $region27: #{_lambda_.1} parent=23 // pred_region
        %s200 = smul.u32 2, %s17
      $region28: #{_lambda_.1} parent=23 // pred_fallthru
        _
    $region24: #{_lambda_.1} parent=5 // pred_fallthru
      _
    %p201 = scmp.le.s32.totalorder 2, %s7
    // Predicated region
    $region29: #{_lambda_.1} parent=5 // pred_check
      %p202 = pneg %p201
    $region30: #{_lambda_.1} parent=5 // pred_check_branch
      %204 = sbr.rel (%p202) target = $region32
    $region31: #{_lambda_.1} parent=5 // pred_region
      %s205 = ssub.s32 %s7, 2
      // Predicated region
      $region33: #{_lambda_.1} parent=31 // pred_check
        %p206 = pneg %p78
      $region34: #{_lambda_.1} parent=31 // pred_check_branch
        %208 = sbr.rel (%p206) target = $region36
      $region35: #{_lambda_.1} parent=31 // pred_region
        %s209 = smul.u32 2, %s19
        %p210 = scmp.lt.s32.totalorder %s18, 1
        %s211 = scalar_select %p210, %s18, 1
        %p212 = scmp.lt.s32.totalorder %s209, 1
        %s213 = scalar_select %p212, %s209, 1
        %s214 = smul.addr %s211, 2
        %s215 = sadd.s32 %s213, %s214
        %s216 = smul.addr %s215, 4
        %s217 = scalar_lea.vmem %s1, %s216
      $region36: #{_lambda_.1} parent=31 // pred_fallthru
        _
    $region32: #{_lambda_.1} parent=5 // pred_fallthru
      _
  $region6: #{_lambda_.1} parent=0 // loop_footer
    %s11 = sadd.s32 1, %s7
  $region7: #{_lambda_.1} parent=0 // loop_footer_branch
    %6 = sbr.rel target = $region3
  $region8: #{_lambda_.1} parent=0 // loop_exit
    _

</llo_original>
